<compile_context>
chip_gen: v6e
topology: v6e:2x2x1
jax: 0.10.0
libtpu: 0.0.40
codegen_flags: <defaults>
</compile_context>

<pallas_src>
import functools

import jax
import jax.numpy as jnp
from jax.experimental import pallas as pl
from jax.experimental.pallas import tpu as pltpu

# Large finite sentinels (avoid inf-inf -> NaN under any reassociation).
_NEG_BIG = -3.0e38
_POS_BIG = 3.0e38


def _triplet_kernel(xr_ref, xct_ref, sqr_ref, sqc_ref, tr_ref, tc_ref,
                    out_ref, ap2_acc, an2_acc, *, margin: float, tn: int):
    # xr_ref:  (TM, Dp) row slab (resident across the column sweep)
    # xct_ref: (Dp, TN) pre-transposed column slab
    # sqr_ref: (TM, 1) f32 row squared-norms; sqc_ref: (1, TN) f32 col squared-norms
    #          (padded columns poisoned to ~3e38 wrapper-side)
    # tr_ref:  (TM, 1) int32 labels; tc_ref: (1, TN) int32 labels (padded cols = sentinel)
    # out_ref: (TM, 1) f32 per-row hinge loss
    # ap2_acc / an2_acc: (TM, 128) f32 running hardest-pos / hardest-neg squared dist
    j = pl.program_id(1)

    @pl.when(j == 0)
    def _():
        ap2_acc[...] = jnp.full_like(ap2_acc, _NEG_BIG)
        an2_acc[...] = jnp.full_like(an2_acc, _POS_BIG)

    # Canonical (M, K) @ (K, N) Gram block on the MXU; native-dtype operands,
    # f32 accumulation.
    gram = jax.lax.dot_general(
        xr_ref[...], xct_ref[...],
        dimension_numbers=(((1,), (0,)), ((), ())),
        preferred_element_type=jnp.float32)                      # (TM, TN)

    # Squared pairwise distances for this block (f32 on the VPU).
    dist2 = sqr_ref[...] + sqc_ref[...] - 2.0 * gram             # (TM, TN)

    # Same-label mask from the two pre-laid-out label vectors (no transpose in-kernel).
    same = tr_ref[...] == tc_ref[...]                            # (TM, TN) bool

    # Padded columns: sentinel label => never a positive; poisoned sq_col => never
    # win the negative min.  No extra validity mask needed.
    ap_cand = jnp.where(same, dist2, _NEG_BIG)
    an_cand = jnp.where(same, _POS_BIG, dist2)

    # Fold TN -> 128 lanes with VPU elementwise max/min over 128-wide lane groups;
    # the single XLU cross-lane reduction is deferred to the epilogue.
    ap128 = ap_cand[:, 0:128]
    an128 = an_cand[:, 0:128]
    for g in range(1, tn // 128):
        ap128 = jnp.maximum(ap128, ap_cand[:, g * 128:(g + 1) * 128])
        an128 = jnp.minimum(an128, an_cand[:, g * 128:(g + 1) * 128])
    ap2_acc[...] = jnp.maximum(ap2_acc[...], ap128)
    an2_acc[...] = jnp.minimum(an2_acc[...], an128)

    @pl.when(j == pl.num_programs(1) - 1)
    def _():
        ap2 = jnp.max(ap2_acc[...], axis=1, keepdims=True)       # (TM, 1)
        an2 = jnp.min(an2_acc[...], axis=1, keepdims=True)       # (TM, 1)
        # Deferred sqrt on the reduced vectors; keep the 1e-12 clamp so the
        # zero-distance / diagonal behavior matches the PyTorch reference exactly.
        dist_ap = jnp.sqrt(jnp.maximum(ap2, jnp.float32(1e-12)))
        dist_an = jnp.sqrt(jnp.maximum(an2, jnp.float32(1e-12)))
        # MarginRankingLoss with y=1: max(0, -(dist_an - dist_ap) + margin)
        out_ref[...] = jnp.maximum(dist_ap - dist_an + jnp.float32(margin),
                                   jnp.float32(0.0))


def _round_up(a: int, b: int) -> int:
    return (a + b - 1) // b * b


def _choose_tile(n_pad: int, d_pad: int, itemsize: int, vmem_budget: int) -> int:
    """Largest of {512, 256, 128} dividing n_pad, with >=2 row tiles when possible
    (feeds both v7x TensorCores) and an estimated VMEM footprint under budget."""
    for t in (512, 256, 128):
        if n_pad % t != 0:
            continue
        if n_pad // t < 2 and n_pad > 128:
            continue  # keep at least 2 row tiles for megacore sharding
        est = (2 * t * d_pad * itemsize      # row slab (double buffered)
               + 2 * d_pad * t * itemsize    # column slab (double buffered)
               + 2 * t * 128 * 4             # (tile, 128) accumulators
               + 6 * t * t * 4)              # per-block f32 temporaries
        if est <= vmem_budget:
            return t
    return 128


def triplet_loss(inputs: jax.Array, targets: jax.Array, margin: float = 0.3,
                 vmem_limit_bytes: int = 48 * 1024 * 1024) -> jax.Array:
    """Batch-hard triplet loss. inputs: [n, d] float, targets: [n] int."""
    n, d = inputs.shape
    n_pad = _round_up(n, 128)
    d_pad = _round_up(d, 128)
    itemsize = jnp.dtype(inputs.dtype).itemsize
    tile = _choose_tile(n_pad, d_pad, itemsize, int(0.75 * vmem_limit_bytes))

    # Zero-pad: zero feature columns don't change norms or dot products.
    x = jnp.pad(inputs, ((0, n_pad - n), (0, d_pad - d)))        # (n_pad, d_pad), native dtype
    x_t = x.T                                                    # (d_pad, n_pad) canonical RHS
    x32 = x.astype(jnp.float32)
    sq = jnp.sum(x32 * x32, axis=1)                              # (n_pad,) f32
    sq_row = sq.reshape(n_pad, 1)
    # Poison padded columns' squared norm so they never win the negative min.
    col_valid = jnp.arange(n_pad) < n
    sq_col = jnp.where(col_valid, sq, jnp.float32(_POS_BIG)).reshape(1, n_pad)

    # Sentinel label for padded entries (never equal to a real label).
    t32 = targets.astype(jnp.int32)
    sentinel = jnp.min(t32) - 1
    t_pad = jnp.concatenate(
        [t32, jnp.broadcast_to(sentinel, (n_pad - n,)).astype(jnp.int32)])
    t_row = t_pad.reshape(n_pad, 1)
    t_col = t_pad.reshape(1, n_pad)

    grid = (n_pad // tile, n_pad // tile)
    kernel = functools.partial(_triplet_kernel, margin=float(margin), tn=tile)

    cost = pl.CostEstimate(
        flops=int(2 * n_pad * n_pad * d_pad),
        transcendentals=int(2 * n_pad),
        bytes_accessed=int((grid[0] + 1) * n_pad * d_pad * itemsize + 16 * n_pad),
    )

    per_row = pl.pallas_call(
        kernel,
        out_shape=jax.ShapeDtypeStruct((n_pad, 1), jnp.float32),
        grid_spec=pltpu.PrefetchScalarGridSpec(
            num_scalar_prefetch=0,
            grid=grid,
            in_specs=[
                # Row slab of x: resident across the whole column sweep (no j dep).
                pl.BlockSpec((tile, d_pad), lambda i, j: (i, 0)),
                # Pre-transposed column slab (lane-dense contiguous RHS).
                # (Optionally pipeline_mode=pl.Buffered(3) on v6e for very wide d.)
                pl.BlockSpec((d_pad, tile), lambda i, j: (0, j)),
                pl.BlockSpec((tile, 1), lambda i, j: (i, 0)),    # sq, row layout
                pl.BlockSpec((1, tile), lambda i, j: (0, j)),    # sq, col layout (poisoned pad)
                pl.BlockSpec((tile, 1), lambda i, j: (i, 0)),    # labels, row layout
                pl.BlockSpec((1, tile), lambda i, j: (0, j)),    # labels, col layout (sentinel pad)
            ],
            out_specs=pl.BlockSpec((tile, 1), lambda i, j: (i, 0)),
            scratch_shapes=[
                pltpu.VMEM((tile, 128), jnp.float32),   # hardest-positive dist^2 (lane-dense)
                pltpu.VMEM((tile, 128), jnp.float32),   # hardest-negative dist^2 (lane-dense)
            ],
        ),
        compiler_params=pltpu.CompilerParams(
            dimension_semantics=("parallel", "arbitrary"),
            vmem_limit_bytes=vmem_limit_bytes,
        ),
        cost_estimate=cost,
    )(x, x_t, sq_row, sq_col, t_row, t_col)

    # Padded rows are excluded; divide by the true batch size (mean reduction).
    return jnp.mean(per_row[:n, 0])


def _reference(inputs, targets, margin=0.3):
    # Pure-JAX reference mirroring the PyTorch module, for sanity checking.
    x = inputs.astype(jnp.float32)
    sq = jnp.sum(x * x, axis=1, keepdims=True)
    dist2 = sq + sq.T - 2.0 * (x @ x.T)
    dist = jnp.sqrt(jnp.maximum(dist2, 1e-12))
    mask = targets[:, None] == targets[None, :]
    dist_ap = jnp.max(jnp.where(mask, dist, -jnp.inf), axis=1)
    dist_an = jnp.min(jnp.where(mask, jnp.inf, dist), axis=1)
    return jnp.mean(jnp.maximum(dist_ap - dist_an + margin, 0.0))


if __name__ == "__main__":
    key = jax.random.PRNGKey(0)
    k1, k2, k3 = jax.random.split(key, 3)

    # Small case consistent with the module: batch=8, feat_dim=32.
    n, d = 8, 32
    inputs = jax.random.normal(k1, (n, d), dtype=jnp.float32)
    targets = jnp.array([0, 0, 1, 1, 2, 2, 3, 3], dtype=jnp.int32)
    loss = triplet_loss(inputs, targets, margin=0.3)
    jax.block_until_ready(loss)
    ref = _reference(inputs, targets, margin=0.3)
    assert jnp.allclose(loss, ref, rtol=1e-4, atol=1e-5), (loss, ref)

    # Unaligned, multi-tile case exercising the grid, accumulators, and padding.
    n2, d2 = 600, 40
    x2 = jax.random.normal(k2, (n2, d2), dtype=jnp.float32)
    t2 = jax.random.randint(k3, (n2,), 0, 10, dtype=jnp.int32)
    loss2 = triplet_loss(x2, t2, margin=0.3)
    jax.block_until_ready(loss2)
    ref2 = _reference(x2, t2, margin=0.3)
    assert jnp.allclose(loss2, ref2, rtol=1e-4, atol=1e-4), (loss2, ref2)

    print("KERNEL_OK")
</pallas_src>

<mosaic_0001>
module attributes {stable_mosaic.version = 11 : i64} {
  func.func @_triplet_kernel(%arg0: i32, %arg1: i32, %arg2: memref<128x128xf32, #tpu.memory_space<vmem>>, %arg3: memref<128x128xf32, #tpu.memory_space<vmem>>, %arg4: memref<128x1xf32, #tpu.memory_space<vmem>>, %arg5: memref<1x128xf32, #tpu.memory_space<vmem>>, %arg6: memref<128x1xi32, #tpu.memory_space<vmem>>, %arg7: memref<1x128xi32, #tpu.memory_space<vmem>>, %arg8: memref<128x1xf32, #tpu.memory_space<vmem>>, %arg9: memref<128x128xf32, #tpu.memory_space<vmem>>, %arg10: memref<128x128xf32, #tpu.memory_space<vmem>>) attributes {dimension_semantics = [#tpu.dimension_semantics<parallel>, #tpu.dimension_semantics<arbitrary>], iteration_bounds = array<i64: 1, 1>, scalar_prefetch = 0 : i64, scratch_operands = 2 : i64, tpu.core_type = #tpu.core_type<tc>, window_params = [{transform_indices = @transform_0, window_bounds = array<i64: 128, 128>}, {transform_indices = @transform_1, window_bounds = array<i64: 128, 128>}, {transform_indices = @transform_2, window_bounds = array<i64: 128, 1>}, {transform_indices = @transform_3, window_bounds = array<i64: 1, 128>}, {transform_indices = @transform_4, window_bounds = array<i64: 128, 1>}, {transform_indices = @transform_5, window_bounds = array<i64: 1, 128>}, {transform_indices = @transform_6, window_bounds = array<i64: 128, 1>}]} {
    %c0_i32 = arith.constant 0 : i32
    %0 = arith.cmpi eq, %arg1, %c0_i32 : i32
    %1 = arith.extui %0 : i1 to i32
    %c0_i32_0 = arith.constant 0 : i32
    %2 = arith.cmpi ne, %1, %c0_i32_0 : i32
    scf.if %2 {
      %cst_25 = arith.constant -3.000000e+38 : f32
      %32 = vector.broadcast %cst_25 : f32 to vector<128x128xf32>
      %c0_26 = arith.constant 0 : index
      %c0_27 = arith.constant 0 : index
      %33 = vector.load %arg9[%c0_26, %c0_27] : memref<128x128xf32, #tpu.memory_space<vmem>>, vector<128x128xf32>
      tpu.vector_store %arg9[%c0_26, %c0_27], %32 {strides = array<i32>} : memref<128x128xf32, #tpu.memory_space<vmem>>, vector<128x128xf32>,
      %cst_28 = arith.constant 3.000000e+38 : f32
      %34 = vector.broadcast %cst_28 : f32 to vector<128x128xf32>
      %c0_29 = arith.constant 0 : index
      %c0_30 = arith.constant 0 : index
      %35 = vector.load %arg10[%c0_29, %c0_30] : memref<128x128xf32, #tpu.memory_space<vmem>>, vector<128x128xf32>
      tpu.vector_store %arg10[%c0_29, %c0_30], %34 {strides = array<i32>} : memref<128x128xf32, #tpu.memory_space<vmem>>, vector<128x128xf32>,
    } else {
    }
    %c0 = arith.constant 0 : index
    %c0_1 = arith.constant 0 : index
    %3 = vector.load %arg2[%c0, %c0_1] : memref<128x128xf32, #tpu.memory_space<vmem>>, vector<128x128xf32>
    %c0_2 = arith.constant 0 : index
    %c0_3 = arith.constant 0 : index
    %4 = vector.load %arg3[%c0_2, %c0_3] : memref<128x128xf32, #tpu.memory_space<vmem>>, vector<128x128xf32>
    %cst = arith.constant dense<0.000000e+00> : vector<128x128xf32>
    %5 = tpu.matmul %3, %4, %cst {dimension_numbers = #tpu.dot_dimension_numbers<[1], [0], [0], [1], [0, 0, 1, 1], [], []>} : vector<128x128xf32>, vector<128x128xf32>, vector<128x128xf32> -> vector<128x128xf32>
    %c0_4 = arith.constant 0 : index
    %c0_5 = arith.constant 0 : index
    %6 = vector.load %arg4[%c0_4, %c0_5] : memref<128x1xf32, #tpu.memory_space<vmem>>, vector<128x1xf32>
    %c0_6 = arith.constant 0 : index
    %c0_7 = arith.constant 0 : index
    %7 = vector.load %arg5[%c0_6, %c0_7] : memref<1x128xf32, #tpu.memory_space<vmem>>, vector<1x128xf32>
    %8 = vector.broadcast %6 : vector<128x1xf32> to vector<128x128xf32>
    %9 = vector.broadcast %7 : vector<1x128xf32> to vector<128x128xf32>
    %10 = arith.addf %8, %9 : vector<128x128xf32>
    %cst_8 = arith.constant 2.000000e+00 : f32
    %11 = vector.broadcast %cst_8 : f32 to vector<128x128xf32>
    %12 = arith.mulf %11, %5 : vector<128x128xf32>
    %13 = arith.subf %10, %12 : vector<128x128xf32>
    %c0_9 = arith.constant 0 : index
    %c0_10 = arith.constant 0 : index
    %14 = vector.load %arg6[%c0_9, %c0_10] : memref<128x1xi32, #tpu.memory_space<vmem>>, vector<128x1xi32>
    %c0_11 = arith.constant 0 : index
    %c0_12 = arith.constant 0 : index
    %15 = vector.load %arg7[%c0_11, %c0_12] : memref<1x128xi32, #tpu.memory_space<vmem>>, vector<1x128xi32>
    %16 = vector.broadcast %14 : vector<128x1xi32> to vector<128x128xi32>
    %17 = vector.broadcast %15 : vector<1x128xi32> to vector<128x128xi32>
    %18 = arith.cmpi eq, %16, %17 : vector<128x128xi32>
    %cst_13 = arith.constant -3.000000e+38 : f32
    %19 = vector.broadcast %cst_13 : f32 to vector<128x128xf32>
    %20 = arith.select %18, %13, %19 : vector<128x128xi1>, vector<128x128xf32>
    %cst_14 = arith.constant 3.000000e+38 : f32
    %21 = vector.broadcast %cst_14 : f32 to vector<128x128xf32>
    %22 = arith.select %18, %21, %13 : vector<128x128xi1>, vector<128x128xf32>
    %c0_15 = arith.constant 0 : index
    %c0_16 = arith.constant 0 : index
    %23 = vector.load %arg9[%c0_15, %c0_16] : memref<128x128xf32, #tpu.memory_space<vmem>>, vector<128x128xf32>
    %24 = arith.maximumf %23, %20 : vector<128x128xf32>
    %c0_17 = arith.constant 0 : index
    %c0_18 = arith.constant 0 : index
    %25 = vector.load %arg9[%c0_17, %c0_18] : memref<128x128xf32, #tpu.memory_space<vmem>>, vector<128x128xf32>
    tpu.vector_store %arg9[%c0_17, %c0_18], %24 {strides = array<i32>} : memref<128x128xf32, #tpu.memory_space<vmem>>, vector<128x128xf32>,
    %c0_19 = arith.constant 0 : index
    %c0_20 = arith.constant 0 : index
    %26 = vector.load %arg10[%c0_19, %c0_20] : memref<128x128xf32, #tpu.memory_space<vmem>>, vector<128x128xf32>
    %27 = arith.minimumf %26, %22 : vector<128x128xf32>
    %c0_21 = arith.constant 0 : index
    %c0_22 = arith.constant 0 : index
    %28 = vector.load %arg10[%c0_21, %c0_22] : memref<128x128xf32, #tpu.memory_space<vmem>>, vector<128x128xf32>
    tpu.vector_store %arg10[%c0_21, %c0_22], %27 {strides = array<i32>} : memref<128x128xf32, #tpu.memory_space<vmem>>, vector<128x128xf32>,
    %c0_i32_23 = arith.constant 0 : i32
    %29 = arith.cmpi eq, %arg1, %c0_i32_23 : i32
    %30 = arith.extui %29 : i1 to i32
    %c0_i32_24 = arith.constant 0 : i32
    %31 = arith.cmpi ne, %30, %c0_i32_24 : i32
    scf.if %31 {
      %c0_25 = arith.constant 0 : index
      %c0_26 = arith.constant 0 : index
      %32 = vector.load %arg9[%c0_25, %c0_26] : memref<128x128xf32, #tpu.memory_space<vmem>>, vector<128x128xf32>
      %cst_27 = arith.constant dense<0xFF800000> : vector<128xf32>
      %33 = vector.multi_reduction <maximumf>, %32, %cst_27 [1] : vector<128x128xf32> to vector<128xf32>
      %34 = vector.shape_cast %33 : vector<128xf32> to vector<128x1xf32>
      %c0_28 = arith.constant 0 : index
      %c0_29 = arith.constant 0 : index
      %35 = vector.load %arg10[%c0_28, %c0_29] : memref<128x128xf32, #tpu.memory_space<vmem>>, vector<128x128xf32>
      %cst_30 = arith.constant dense<0x7F800000> : vector<128xf32>
      %36 = vector.multi_reduction <minimumf>, %35, %cst_30 [1] : vector<128x128xf32> to vector<128xf32>
      %37 = vector.shape_cast %36 : vector<128xf32> to vector<128x1xf32>
      %cst_31 = arith.constant 9.99999996E-13 : f32
      %38 = vector.broadcast %cst_31 : f32 to vector<128x1xf32>
      %39 = arith.maximumf %34, %38 : vector<128x1xf32>
      %40 = math.sqrt %39 : vector<128x1xf32>
      %cst_32 = arith.constant 9.99999996E-13 : f32
      %41 = vector.broadcast %cst_32 : f32 to vector<128x1xf32>
      %42 = arith.maximumf %37, %41 : vector<128x1xf32>
      %43 = math.sqrt %42 : vector<128x1xf32>
      %44 = arith.subf %40, %43 : vector<128x1xf32>
      %cst_33 = arith.constant 3.000000e-01 : f32
      %45 = vector.broadcast %cst_33 : f32 to vector<128x1xf32>
      %46 = arith.addf %44, %45 : vector<128x1xf32>
      %cst_34 = arith.constant 0.000000e+00 : f32
      %47 = vector.broadcast %cst_34 : f32 to vector<128x1xf32>
      %48 = arith.maximumf %46, %47 : vector<128x1xf32>
      %c0_35 = arith.constant 0 : index
      %c0_36 = arith.constant 0 : index
      %49 = vector.load %arg8[%c0_35, %c0_36] : memref<128x1xf32, #tpu.memory_space<vmem>>, vector<128x1xf32>
      tpu.vector_store %arg8[%c0_35, %c0_36], %48 {strides = array<i32>} : memref<128x1xf32, #tpu.memory_space<vmem>>, vector<128x1xf32>,
    } else {
    }
    return
  }
  func.func @transform_0(%arg0: i32, %arg1: i32) -> (i32, i32) {
    %c0_i32 = arith.constant 0 : i32
    %c0_i32_0 = arith.constant 0 : i32
    return %arg0, %c0_i32 : i32, i32
  }
  func.func @transform_1(%arg0: i32, %arg1: i32) -> (i32, i32) {
    %c0_i32 = arith.constant 0 : i32
    %c0_i32_0 = arith.constant 0 : i32
    return %c0_i32, %arg1 : i32, i32
  }
  func.func @transform_2(%arg0: i32, %arg1: i32) -> (i32, i32) {
    %c0_i32 = arith.constant 0 : i32
    %c0_i32_0 = arith.constant 0 : i32
    return %arg0, %c0_i32 : i32, i32
  }
  func.func @transform_3(%arg0: i32, %arg1: i32) -> (i32, i32) {
    %c0_i32 = arith.constant 0 : i32
    %c0_i32_0 = arith.constant 0 : i32
    return %c0_i32, %arg1 : i32, i32
  }
  func.func @transform_4(%arg0: i32, %arg1: i32) -> (i32, i32) {
    %c0_i32 = arith.constant 0 : i32
    %c0_i32_0 = arith.constant 0 : i32
    return %arg0, %c0_i32 : i32, i32
  }
  func.func @transform_5(%arg0: i32, %arg1: i32) -> (i32, i32) {
    %c0_i32 = arith.constant 0 : i32
    %c0_i32_0 = arith.constant 0 : i32
    return %c0_i32, %arg1 : i32, i32
  }
  func.func @transform_6(%arg0: i32, %arg1: i32) -> (i32, i32) {
    %c0_i32 = arith.constant 0 : i32
    %c0_i32_0 = arith.constant 0 : i32
    return %arg0, %c0_i32 : i32, i32
  }
}

</mosaic_0001>

<llo_original>
// kernel: tpu_custom_call.1
$region0: #{tpu_custom_call.1}
  #allocation0 [shape = 'u32[]', space=smem, size = 0x4, offset = 0x4, fixed_abs, tag = 'smem constant byte address 0x4 - core index']
  #allocation1 [shape = 'u32[144,128]{1,0:T(1,128)}', space=vmem, size = 0x12000, scoped, tag = 'internal scratch']
  #allocation2 [shape = 'f32[128,128]{1,0:T(8,128)}', space=vmem, size = 0x10000, scoped, tag = 'scratch operand']
  #allocation3 [shape = 'f32[128,128]{1,0:T(8,128)}', space=vmem, size = 0x10000, scoped, tag = 'scratch operand']
  %s0 = inlined_call_operand.vmem [shape: f32[128,128], index: 0, kind: input, shape index: {}]
  %s1 = inlined_call_operand.vmem [shape: f32[128,128], index: 1, kind: input, shape index: {}]
  %s2 = inlined_call_operand.vmem [shape: f32[128,1], index: 2, kind: input, shape index: {}]
  %s3 = inlined_call_operand.vmem [shape: f32[1,128], index: 3, kind: input, shape index: {}]
  %s4 = inlined_call_operand.vmem [shape: s32[128,1], index: 4, kind: input, shape index: {}]
  %s5 = inlined_call_operand.vmem [shape: s32[1,128], index: 5, kind: input, shape index: {}]
  %s6 = inlined_call_operand.vmem [shape: f32[128,1], index: 6, kind: output, shape index: {}]
  %s7 = sld [smem:[#allocation0]]
  $region42: #{tpu_custom_call.1} parent=0
    _
  %s9 = ssub.s32 1, %s7
  %s10 = scalar_select 0, %s9, %s7
  // Predicated region
  $region2: #{tpu_custom_call.1} parent=0 // pred_check
    _
  $region3: #{tpu_custom_call.1} parent=0 // pred_check_branch
    %12 = sbr.rel (0) target = $region5
  $region4: #{tpu_custom_call.1} parent=0 // pred_region
    _
  $region5: #{tpu_custom_call.1} parent=0 // pred_fallthru
    _
  // Predicated region
  $region6: #{tpu_custom_call.1} parent=0 // pred_check
    _
  $region7: #{tpu_custom_call.1} parent=0 // pred_check_branch
    %14 = sbr.rel (0) target = $region9
  $region8: #{tpu_custom_call.1} parent=0 // pred_region
    _
  $region9: #{tpu_custom_call.1} parent=0 // pred_fallthru
    _
  // Predicated region
  $region10: #{tpu_custom_call.1} parent=0 // pred_check
    _
  $region11: #{tpu_custom_call.1} parent=0 // pred_check_branch
    %16 = sbr.rel (0) target = $region13
  $region12: #{tpu_custom_call.1} parent=0 // pred_region
    _
  $region13: #{tpu_custom_call.1} parent=0 // pred_fallthru
    _
  // Predicated region
  $region14: #{tpu_custom_call.1} parent=0 // pred_check
    _
  $region15: #{tpu_custom_call.1} parent=0 // pred_check_branch
    %18 = sbr.rel (0) target = $region17
  $region16: #{tpu_custom_call.1} parent=0 // pred_region
    _
  $region17: #{tpu_custom_call.1} parent=0 // pred_fallthru
    _
  // Predicated region
  $region18: #{tpu_custom_call.1} parent=0 // pred_check
    _
  $region19: #{tpu_custom_call.1} parent=0 // pred_check_branch
    %20 = sbr.rel (0) target = $region21
  $region20: #{tpu_custom_call.1} parent=0 // pred_region
    _
  $region21: #{tpu_custom_call.1} parent=0 // pred_fallthru
    _
  // Predicated region
  $region22: #{tpu_custom_call.1} parent=0 // pred_check
    _
  $region23: #{tpu_custom_call.1} parent=0 // pred_check_branch
    %22 = sbr.rel (0) target = $region25
  $region24: #{tpu_custom_call.1} parent=0 // pred_region
    _
  $region25: #{tpu_custom_call.1} parent=0 // pred_fallthru
    _
  %p23 = scmp.eq.s32.totalorder 0, 0
  // Predicated region
  $region26: #{tpu_custom_call.1} parent=0 // pred_check
    %p24 = pneg %p23
  $region27: #{tpu_custom_call.1} parent=0 // pred_check_branch
    %26 = sbr.rel (%p24) target = $region29
  $region28: #{tpu_custom_call.1} parent=0 // pred_region
    %27 = vst [vmem:[#allocation2] sm:$0xff] -3e+38
    %28 = vst [vmem:[#allocation2 + $0x8] sm:$0xff] -3e+38
    %29 = vst [vmem:[#allocation2 + $0x10] sm:$0xff] -3e+38
    %30 = vst [vmem:[#allocation2 + $0x18] sm:$0xff] -3e+38
    %31 = vst [vmem:[#allocation2 + $0x20] sm:$0xff] -3e+38
    %32 = vst [vmem:[#allocation2 + $0x28] sm:$0xff] -3e+38
    %33 = vst [vmem:[#allocation2 + $0x30] sm:$0xff] -3e+38
    %34 = vst [vmem:[#allocation2 + $0x38] sm:$0xff] -3e+38
    %35 = vst [vmem:[#allocation2 + $0x40] sm:$0xff] -3e+38
    %36 = vst [vmem:[#allocation2 + $0x48] sm:$0xff] -3e+38
    %37 = vst [vmem:[#allocation2 + $0x50] sm:$0xff] -3e+38
    %38 = vst [vmem:[#allocation2 + $0x58] sm:$0xff] -3e+38
    %39 = vst [vmem:[#allocation2 + $0x60] sm:$0xff] -3e+38
    %40 = vst [vmem:[#allocation2 + $0x68] sm:$0xff] -3e+38
    %41 = vst [vmem:[#allocation2 + $0x70] sm:$0xff] -3e+38
    %42 = vst [vmem:[#allocation2 + $0x78] sm:$0xff] -3e+38
    %43 = vst [vmem:[#allocation3] sm:$0xff] 3e+38
    %44 = vst [vmem:[#allocation3 + $0x8] sm:$0xff] 3e+38
    %45 = vst [vmem:[#allocation3 + $0x10] sm:$0xff] 3e+38
    %46 = vst [vmem:[#allocation3 + $0x18] sm:$0xff] 3e+38
    %47 = vst [vmem:[#allocation3 + $0x20] sm:$0xff] 3e+38
    %48 = vst [vmem:[#allocation3 + $0x28] sm:$0xff] 3e+38
    %49 = vst [vmem:[#allocation3 + $0x30] sm:$0xff] 3e+38
    %50 = vst [vmem:[#allocation3 + $0x38] sm:$0xff] 3e+38
    %51 = vst [vmem:[#allocation3 + $0x40] sm:$0xff] 3e+38
    %52 = vst [vmem:[#allocation3 + $0x48] sm:$0xff] 3e+38
    %53 = vst [vmem:[#allocation3 + $0x50] sm:$0xff] 3e+38
    %54 = vst [vmem:[#allocation3 + $0x58] sm:$0xff] 3e+38
    %55 = vst [vmem:[#allocation3 + $0x60] sm:$0xff] 3e+38
    %56 = vst [vmem:[#allocation3 + $0x68] sm:$0xff] 3e+38
    %57 = vst [vmem:[#allocation3 + $0x70] sm:$0xff] 3e+38
    %58 = vst [vmem:[#allocation3 + $0x78] sm:$0xff] 3e+38
  $region29: #{tpu_custom_call.1} parent=0 // pred_fallthru
    _
  %v59 = vld [vmem:[%s0] sm:$0xff]
  %v60 = vld [vmem:[%s0 + $0x8] sm:$0xff]
  %v61 = vld [vmem:[%s0 + $0x10] sm:$0xff]
  %v62 = vld [vmem:[%s0 + $0x18] sm:$0xff]
  %v63 = vld [vmem:[%s0 + $0x20] sm:$0xff]
  %v64 = vld [vmem:[%s0 + $0x28] sm:$0xff]
  %v65 = vld [vmem:[%s0 + $0x30] sm:$0xff]
  %v66 = vld [vmem:[%s0 + $0x38] sm:$0xff]
  %v67 = vld [vmem:[%s0 + $0x40] sm:$0xff]
  %v68 = vld [vmem:[%s0 + $0x48] sm:$0xff]
  %v69 = vld [vmem:[%s0 + $0x50] sm:$0xff]
  %v70 = vld [vmem:[%s0 + $0x58] sm:$0xff]
  %v71 = vld [vmem:[%s0 + $0x60] sm:$0xff]
  %v72 = vld [vmem:[%s0 + $0x68] sm:$0xff]
  %v73 = vld [vmem:[%s0 + $0x70] sm:$0xff]
  %v74 = vld [vmem:[%s0 + $0x78] sm:$0xff]
  %v75 = vld [vmem:[%s1] sm:$0xff]
  %v76 = vld [vmem:[%s1 + $0x8] sm:$0xff]
  %v77 = vld [vmem:[%s1 + $0x10] sm:$0xff]
  %v78 = vld [vmem:[%s1 + $0x18] sm:$0xff]
  %v79 = vld [vmem:[%s1 + $0x20] sm:$0xff]
  %v80 = vld [vmem:[%s1 + $0x28] sm:$0xff]
  %v81 = vld [vmem:[%s1 + $0x30] sm:$0xff]
  %v82 = vld [vmem:[%s1 + $0x38] sm:$0xff]
  %v83 = vld [vmem:[%s1 + $0x40] sm:$0xff]
  %v84 = vld [vmem:[%s1 + $0x48] sm:$0xff]
  %v85 = vld [vmem:[%s1 + $0x50] sm:$0xff]
  %v86 = vld [vmem:[%s1 + $0x58] sm:$0xff]
  %v87 = vld [vmem:[%s1 + $0x60] sm:$0xff]
  %v88 = vld [vmem:[%s1 + $0x68] sm:$0xff]
  %v89 = vld [vmem:[%s1 + $0x70] sm:$0xff]
  %v90 = vld [vmem:[%s1 + $0x78] sm:$0xff]
  %91 = vmatprep.subr.mxu0 0.0
  %92 = vmatpush1.msra.mxu0 %v90
  %93 = vmatprep.subr.mxu0 0.0
  %94 = vmatpush1.msra.mxu0 %v89
  %95 = vmatprep.subr.mxu0 0.0
  %96 = vmatpush1.msra.mxu0 %v88
  %97 = vmatprep.subr.mxu0 0.0
  %98 = vmatpush1.msra.mxu0 %v87
  %99 = vmatprep.subr.mxu0 0.0
  %100 = vmatpush1.msra.mxu0 %v86
  %101 = vmatprep.subr.mxu0 0.0
  %102 = vmatpush1.msra.mxu0 %v85
  %103 = vmatprep.subr.mxu0 0.0
  %104 = vmatpush1.msra.mxu0 %v84
  %105 = vmatprep.subr.mxu0 0.0
  %106 = vmatpush1.msra.mxu0 %v83
  %107 = vmatprep.subr.mxu0 0.0
  %108 = vmatpush1.msra.mxu0 %v82
  %109 = vmatprep.subr.mxu0 0.0
  %110 = vmatpush1.msra.mxu0 %v81
  %111 = vmatprep.subr.mxu0 0.0
  %112 = vmatpush1.msra.mxu0 %v80
  %113 = vmatprep.subr.mxu0 0.0
  %114 = vmatpush1.msra.mxu0 %v79
  %115 = vmatprep.subr.mxu0 0.0
  %116 = vmatpush1.msra.mxu0 %v78
  %117 = vmatprep.subr.mxu0 0.0
  %118 = vmatpush1.msra.mxu0 %v77
  %119 = vmatprep.subr.mxu0 0.0
  %120 = vmatpush1.msra.mxu0 %v76
  %121 = vmatprep.subr.mxu0 0.0
  %122 = vmatpush1.msra.mxu0 %v75
  %123 = vmatprep.subr.mxu0 0.0
  %124 = vmatpush2.msra.mxu0 0.0
  %125 = vmatprep.subr.mxu0 0.0
  %126 = vmatpush2.msra.mxu0 0.0
  %127 = vmatprep.subr.mxu0 0.0
  %128 = vmatpush2.msra.mxu0 0.0
  %129 = vmatprep.subr.mxu0 0.0
  %130 = vmatpush2.msra.mxu0 0.0
  %131 = vmatprep.subr.mxu0 0.0
  %132 = vmatpush2.msra.mxu0 0.0
  %133 = vmatprep.subr.mxu0 0.0
  %134 = vmatpush2.msra.mxu0 0.0
  %135 = vmatprep.subr.mxu0 0.0
  %136 = vmatpush2.msra.mxu0 0.0
  %137 = vmatprep.subr.mxu0 0.0
  %138 = vmatpush2.msra.mxu0 0.0
  %139 = vmatprep.subr.mxu0 0.0
  %140 = vmatpush2.msra.mxu0 0.0
  %141 = vmatprep.subr.mxu0 0.0
  %142 = vmatpush2.msra.mxu0 0.0
  %143 = vmatprep.subr.mxu0 0.0
  %144 = vmatpush2.msra.mxu0 0.0
  %145 = vmatprep.subr.mxu0 0.0
  %146 = vmatpush2.msra.mxu0 0.0
  %147 = vmatprep.subr.mxu0 0.0
  %148 = vmatpush2.msra.mxu0 0.0
  %149 = vmatprep.subr.mxu0 0.0
  %150 = vmatpush2.msra.mxu0 0.0
  %151 = vmatprep.subr.mxu0 0.0
  %152 = vmatpush2.msra.mxu0 0.0
  %153 = vmatprep.subr.mxu0 0.0
  %154 = vmatpush2.msra.mxu0 0.0
  %155 = vmatprep.mubr.f32.mxu0 0.0
  %156 = vmatmul.mubr.f32.gmra.mxu0 %v59
  %v157 = vpop.f32.mrf.mxu0
  %v158 = vadd.f32 0.0, %v157
  %v159 = vpop.f32.mrf.mxu0
  %160 = vmatprep.mubr.f32.mxu0 0.0
  %161 = vmatmul.mubr.f32.gmra.mxu0 %v60
  %v162 = vpop.f32.mrf.mxu0
  %v163 = vadd.f32 0.0, %v162
  %v164 = vpop.f32.mrf.mxu0
  %165 = vmatprep.mubr.f32.mxu0 0.0
  %166 = vmatmul.mubr.f32.gmra.mxu0 %v61
  %v167 = vpop.f32.mrf.mxu0
  %v168 = vadd.f32 0.0, %v167
  %v169 = vpop.f32.mrf.mxu0
  %170 = vmatprep.mubr.f32.mxu0 0.0
  %171 = vmatmul.mubr.f32.gmra.mxu0 %v62
  %v172 = vpop.f32.mrf.mxu0
  %v173 = vadd.f32 0.0, %v172
  %v174 = vpop.f32.mrf.mxu0
  %175 = vmatprep.mubr.f32.mxu0 0.0
  %176 = vmatmul.mubr.f32.gmra.mxu0 %v63
  %v177 = vpop.f32.mrf.mxu0
  %v178 = vadd.f32 0.0, %v177
  %v179 = vpop.f32.mrf.mxu0
  %180 = vmatprep.mubr.f32.mxu0 0.0
  %181 = vmatmul.mubr.f32.gmra.mxu0 %v64
  %v182 = vpop.f32.mrf.mxu0
  %v183 = vadd.f32 0.0, %v182
  %v184 = vpop.f32.mrf.mxu0
  %185 = vmatprep.mubr.f32.mxu0 0.0
  %186 = vmatmul.mubr.f32.gmra.mxu0 %v65
  %v187 = vpop.f32.mrf.mxu0
  %v188 = vadd.f32 0.0, %v187
  %v189 = vpop.f32.mrf.mxu0
  %190 = vmatprep.mubr.f32.mxu0 0.0
  %191 = vmatmul.mubr.f32.gmra.mxu0 %v66
  %v192 = vpop.f32.mrf.mxu0
  %v193 = vadd.f32 0.0, %v192
  %v194 = vpop.f32.mrf.mxu0
  %195 = vmatprep.mubr.f32.mxu0 0.0
  %196 = vmatmul.mubr.f32.gmra.mxu0 %v67
  %v197 = vpop.f32.mrf.mxu0
  %v198 = vadd.f32 0.0, %v197
  %v199 = vpop.f32.mrf.mxu0
  %200 = vmatprep.mubr.f32.mxu0 0.0
  %201 = vmatmul.mubr.f32.gmra.mxu0 %v68
  %v202 = vpop.f32.mrf.mxu0
  %v203 = vadd.f32 0.0, %v202
  %v204 = vpop.f32.mrf.mxu0
  %205 = vmatprep.mubr.f32.mxu0 0.0
  %206 = vmatmul.mubr.f32.gmra.mxu0 %v69
  %v207 = vpop.f32.mrf.mxu0
  %v208 = vadd.f32 0.0, %v207
  %v209 = vpop.f32.mrf.mxu0
  %210 = vmatprep.mubr.f32.mxu0 0.0
  %211 = vmatmul.mubr.f32.gmra.mxu0 %v70
  %v212 = vpop.f32.mrf.mxu0
  %v213 = vadd.f32 0.0, %v212
  %v214 = vpop.f32.mrf.mxu0
  %215 = vmatprep.mubr.f32.mxu0 0.0
  %216 = vmatmul.mubr.f32.gmra.mxu0 %v71
  %v217 = vpop.f32.mrf.mxu0
  %v218 = vadd.f32 0.0, %v217
  %v219 = vpop.f32.mrf.mxu0
  %220 = vmatprep.mubr.f32.mxu0 0.0
  %221 = vmatmul.mubr.f32.gmra.mxu0 %v72
  %v222 = vpop.f32.mrf.mxu0
  %v223 = vadd.f32 0.0, %v222
  %v224 = vpop.f32.mrf.mxu0
  %225 = vmatprep.mubr.f32.mxu0 0.0
  %226 = vmatmul.mubr.f32.gmra.mxu0 %v73
  %v227 = vpop.f32.mrf.mxu0
  %v228 = vadd.f32 0.0, %v227
  %v229 = vpop.f32.mrf.mxu0
  %230 = vmatprep.mubr.f32.mxu0 0.0
  %231 = vmatmul.mubr.f32.gmra.mxu0 %v74
  %v232 = vpop.f32.mrf.mxu0
  %v233 = vadd.f32 0.0, %v232
  %v234 = vpop.f32.mrf.mxu0
  %235 = vdwg.mxu0
  %v236 = vld [vmem:[%s2] sm:$0xff]
  %v237 = vld [vmem:[%s2 + $0x8] sm:$0xff]
  %v238 = vld [vmem:[%s2 + $0x10] sm:$0xff]
  %v239 = vld [vmem:[%s2 + $0x18] sm:$0xff]
  %v240 = vld [vmem:[%s2 + $0x20] sm:$0xff]
  %v241 = vld [vmem:[%s2 + $0x28] sm:$0xff]
  %v242 = vld [vmem:[%s2 + $0x30] sm:$0xff]
  %v243 = vld [vmem:[%s2 + $0x38] sm:$0xff]
  %v244 = vld [vmem:[%s2 + $0x40] sm:$0xff]
  %v245 = vld [vmem:[%s2 + $0x48] sm:$0xff]
  %v246 = vld [vmem:[%s2 + $0x50] sm:$0xff]
  %v247 = vld [vmem:[%s2 + $0x58] sm:$0xff]
  %v248 = vld [vmem:[%s2 + $0x60] sm:$0xff]
  %v249 = vld [vmem:[%s2 + $0x68] sm:$0xff]
  %v250 = vld [vmem:[%s2 + $0x70] sm:$0xff]
  %v251 = vld [vmem:[%s2 + $0x78] sm:$0xff]
  %v252 = vld [vmem:[%s3] sm:$0x1]
  %254 = vset.pattern.permute.xlu0 0
  %255 = vperm.xlu0 %254, %v236
  %v256 = vpop.permute.xlu0 %255
  %259 = vset.pattern.permute.xlu0 0
  %260 = vperm.xlu0 %259, %v237
  %v261 = vpop.permute.xlu0 %260
  %264 = vset.pattern.permute.xlu0 0
  %265 = vperm.xlu0 %264, %v238
  %v266 = vpop.permute.xlu0 %265
  %269 = vset.pattern.permute.xlu0 0
  %270 = vperm.xlu0 %269, %v239
  %v271 = vpop.permute.xlu0 %270
  %274 = vset.pattern.permute.xlu0 0
  %275 = vperm.xlu0 %274, %v240
  %v276 = vpop.permute.xlu0 %275
  %279 = vset.pattern.permute.xlu0 0
  %280 = vperm.xlu0 %279, %v241
  %v281 = vpop.permute.xlu0 %280
  %284 = vset.pattern.permute.xlu0 0
  %285 = vperm.xlu0 %284, %v242
  %v286 = vpop.permute.xlu0 %285
  %289 = vset.pattern.permute.xlu0 0
  %290 = vperm.xlu0 %289, %v243
  %v291 = vpop.permute.xlu0 %290
  %294 = vset.pattern.permute.xlu0 0
  %295 = vperm.xlu0 %294, %v244
  %v296 = vpop.permute.xlu0 %295
  %299 = vset.pattern.permute.xlu0 0
  %300 = vperm.xlu0 %299, %v245
  %v301 = vpop.permute.xlu0 %300
  %304 = vset.pattern.permute.xlu0 0
  %305 = vperm.xlu0 %304, %v246
  %v306 = vpop.permute.xlu0 %305
  %309 = vset.pattern.permute.xlu0 0
  %310 = vperm.xlu0 %309, %v247
  %v311 = vpop.permute.xlu0 %310
  %314 = vset.pattern.permute.xlu0 0
  %315 = vperm.xlu0 %314, %v248
  %v316 = vpop.permute.xlu0 %315
  %319 = vset.pattern.permute.xlu0 0
  %320 = vperm.xlu0 %319, %v249
  %v321 = vpop.permute.xlu0 %320
  %324 = vset.pattern.permute.xlu0 0
  %325 = vperm.xlu0 %324, %v250
  %v326 = vpop.permute.xlu0 %325
  %329 = vset.pattern.permute.xlu0 0
  %330 = vperm.xlu0 %329, %v251
  %v331 = vpop.permute.xlu0 %330
  %v334 = vlaneseq
  %v335 = vshrl.u32 %v334, 7
  %v336 = vsub.s32 0, %v335
  %v337 = vrot.slane %v252, %v336
  %v339 = vadd.f32 %v256, %v337
  %v340 = vadd.f32 %v261, %v337
  %v341 = vadd.f32 %v266, %v337
  %v342 = vadd.f32 %v271, %v337
  %v343 = vadd.f32 %v276, %v337
  %v344 = vadd.f32 %v281, %v337
  %v345 = vadd.f32 %v286, %v337
  %v346 = vadd.f32 %v291, %v337
  %v347 = vadd.f32 %v296, %v337
  %v348 = vadd.f32 %v301, %v337
  %v349 = vadd.f32 %v306, %v337
  %v350 = vadd.f32 %v311, %v337
  %v351 = vadd.f32 %v316, %v337
  %v352 = vadd.f32 %v321, %v337
  %v353 = vadd.f32 %v326, %v337
  %v354 = vadd.f32 %v331, %v337
  %v355 = vmul.f32 %v158, 2.0
  %v356 = vmul.f32 %v163, 2.0
  %v357 = vmul.f32 %v168, 2.0
  %v358 = vmul.f32 %v173, 2.0
  %v359 = vmul.f32 %v178, 2.0
  %v360 = vmul.f32 %v183, 2.0
  %v361 = vmul.f32 %v188, 2.0
  %v362 = vmul.f32 %v193, 2.0
  %v363 = vmul.f32 %v198, 2.0
  %v364 = vmul.f32 %v203, 2.0
  %v365 = vmul.f32 %v208, 2.0
  %v366 = vmul.f32 %v213, 2.0
  %v367 = vmul.f32 %v218, 2.0
  %v368 = vmul.f32 %v223, 2.0
  %v369 = vmul.f32 %v228, 2.0
  %v370 = vmul.f32 %v233, 2.0
  %v371 = vsub.f32 %v339, %v355
  %v372 = vsub.f32 %v340, %v356
  %v373 = vsub.f32 %v341, %v357
  %v374 = vsub.f32 %v342, %v358
  %v375 = vsub.f32 %v343, %v359
  %v376 = vsub.f32 %v344, %v360
  %v377 = vsub.f32 %v345, %v361
  %v378 = vsub.f32 %v346, %v362
  %v379 = vsub.f32 %v347, %v363
  %v380 = vsub.f32 %v348, %v364
  %v381 = vsub.f32 %v349, %v365
  %v382 = vsub.f32 %v350, %v366
  %v383 = vsub.f32 %v351, %v367
  %v384 = vsub.f32 %v352, %v368
  %v385 = vsub.f32 %v353, %v369
  %v386 = vsub.f32 %v354, %v370
  %v387 = vld [vmem:[%s4] sm:$0xff]
  %v388 = vld [vmem:[%s4 + $0x8] sm:$0xff]
  %v389 = vld [vmem:[%s4 + $0x10] sm:$0xff]
  %v390 = vld [vmem:[%s4 + $0x18] sm:$0xff]
  %v391 = vld [vmem:[%s4 + $0x20] sm:$0xff]
  %v392 = vld [vmem:[%s4 + $0x28] sm:$0xff]
  %v393 = vld [vmem:[%s4 + $0x30] sm:$0xff]
  %v394 = vld [vmem:[%s4 + $0x38] sm:$0xff]
  %v395 = vld [vmem:[%s4 + $0x40] sm:$0xff]
  %v396 = vld [vmem:[%s4 + $0x48] sm:$0xff]
  %v397 = vld [vmem:[%s4 + $0x50] sm:$0xff]
  %v398 = vld [vmem:[%s4 + $0x58] sm:$0xff]
  %v399 = vld [vmem:[%s4 + $0x60] sm:$0xff]
  %v400 = vld [vmem:[%s4 + $0x68] sm:$0xff]
  %v401 = vld [vmem:[%s4 + $0x70] sm:$0xff]
  %v402 = vld [vmem:[%s4 + $0x78] sm:$0xff]
  %v403 = vld [vmem:[%s5] sm:$0x1]
  %404 = vset.pattern.permute.xlu0 0
  %405 = vperm.xlu0 %404, %v387
  %v406 = vpop.permute.xlu0 %405
  %407 = vset.pattern.permute.xlu0 0
  %408 = vperm.xlu0 %407, %v388
  %v409 = vpop.permute.xlu0 %408
  %410 = vset.pattern.permute.xlu0 0
  %411 = vperm.xlu0 %410, %v389
  %v412 = vpop.permute.xlu0 %411
  %413 = vset.pattern.permute.xlu0 0
  %414 = vperm.xlu0 %413, %v390
  %v415 = vpop.permute.xlu0 %414
  %416 = vset.pattern.permute.xlu0 0
  %417 = vperm.xlu0 %416, %v391
  %v418 = vpop.permute.xlu0 %417
  %419 = vset.pattern.permute.xlu0 0
  %420 = vperm.xlu0 %419, %v392
  %v421 = vpop.permute.xlu0 %420
  %422 = vset.pattern.permute.xlu0 0
  %423 = vperm.xlu0 %422, %v393
  %v424 = vpop.permute.xlu0 %423
  %425 = vset.pattern.permute.xlu0 0
  %426 = vperm.xlu0 %425, %v394
  %v427 = vpop.permute.xlu0 %426
  %428 = vset.pattern.permute.xlu0 0
  %429 = vperm.xlu0 %428, %v395
  %v430 = vpop.permute.xlu0 %429
  %431 = vset.pattern.permute.xlu0 0
  %432 = vperm.xlu0 %431, %v396
  %v433 = vpop.permute.xlu0 %432
  %434 = vset.pattern.permute.xlu0 0
  %435 = vperm.xlu0 %434, %v397
  %v436 = vpop.permute.xlu0 %435
  %437 = vset.pattern.permute.xlu0 0
  %438 = vperm.xlu0 %437, %v398
  %v439 = vpop.permute.xlu0 %438
  %440 = vset.pattern.permute.xlu0 0
  %441 = vperm.xlu0 %440, %v399
  %v442 = vpop.permute.xlu0 %441
  %443 = vset.pattern.permute.xlu0 0
  %444 = vperm.xlu0 %443, %v400
  %v445 = vpop.permute.xlu0 %444
  %446 = vset.pattern.permute.xlu0 0
  %447 = vperm.xlu0 %446, %v401
  %v448 = vpop.permute.xlu0 %447
  %449 = vset.pattern.permute.xlu0 0
  %450 = vperm.xlu0 %449, %v402
  %v451 = vpop.permute.xlu0 %450
  %v452 = vlaneseq
  %v453 = vshrl.u32 %v452, 7
  %v454 = vsub.s32 0, %v453
  %v455 = vrot.slane %v403, %v454
  %vm456 = vcmp.eq.s32.totalorder %v406, %v455
  %vm457 = vcmp.eq.s32.totalorder %v409, %v455
  %vm458 = vcmp.eq.s32.totalorder %v412, %v455
  %vm459 = vcmp.eq.s32.totalorder %v415, %v455
  %vm460 = vcmp.eq.s32.totalorder %v418, %v455
  %vm461 = vcmp.eq.s32.totalorder %v421, %v455
  %vm462 = vcmp.eq.s32.totalorder %v424, %v455
  %vm463 = vcmp.eq.s32.totalorder %v427, %v455
  %vm464 = vcmp.eq.s32.totalorder %v430, %v455
  %vm465 = vcmp.eq.s32.totalorder %v433, %v455
  %vm466 = vcmp.eq.s32.totalorder %v436, %v455
  %vm467 = vcmp.eq.s32.totalorder %v439, %v455
  %vm468 = vcmp.eq.s32.totalorder %v442, %v455
  %vm469 = vcmp.eq.s32.totalorder %v445, %v455
  %vm470 = vcmp.eq.s32.totalorder %v448, %v455
  %vm471 = vcmp.eq.s32.totalorder %v451, %v455
  %v472 = vsel %vm456, %v371, -3e+38
  %v473 = vsel %vm457, %v372, -3e+38
  %v474 = vsel %vm458, %v373, -3e+38
  %v475 = vsel %vm459, %v374, -3e+38
  %v476 = vsel %vm460, %v375, -3e+38
  %v477 = vsel %vm461, %v376, -3e+38
  %v478 = vsel %vm462, %v377, -3e+38
  %v479 = vsel %vm463, %v378, -3e+38
  %v480 = vsel %vm464, %v379, -3e+38
  %v481 = vsel %vm465, %v380, -3e+38
  %v482 = vsel %vm466, %v381, -3e+38
  %v483 = vsel %vm467, %v382, -3e+38
  %v484 = vsel %vm468, %v383, -3e+38
  %v485 = vsel %vm469, %v384, -3e+38
  %v486 = vsel %vm470, %v385, -3e+38
  %v487 = vsel %vm471, %v386, -3e+38
  %v488 = vsel %vm456, 3e+38, %v371
  %v489 = vsel %vm457, 3e+38, %v372
  %v490 = vsel %vm458, 3e+38, %v373
  %v491 = vsel %vm459, 3e+38, %v374
  %v492 = vsel %vm460, 3e+38, %v375
  %v493 = vsel %vm461, 3e+38, %v376
  %v494 = vsel %vm462, 3e+38, %v377
  %v495 = vsel %vm463, 3e+38, %v378
  %v496 = vsel %vm464, 3e+38, %v379
  %v497 = vsel %vm465, 3e+38, %v380
  %v498 = vsel %vm466, 3e+38, %v381
  %v499 = vsel %vm467, 3e+38, %v382
  %v500 = vsel %vm468, 3e+38, %v383
  %v501 = vsel %vm469, 3e+38, %v384
  %v502 = vsel %vm470, 3e+38, %v385
  %v503 = vsel %vm471, 3e+38, %v386
  %v504 = vld [vmem:[#allocation2] sm:$0xff]
  %v505 = vld [vmem:[#allocation2 + $0x8] sm:$0xff]
  %v506 = vld [vmem:[#allocation2 + $0x10] sm:$0xff]
  %v507 = vld [vmem:[#allocation2 + $0x18] sm:$0xff]
  %v508 = vld [vmem:[#allocation2 + $0x20] sm:$0xff]
  %v509 = vld [vmem:[#allocation2 + $0x28] sm:$0xff]
  %v510 = vld [vmem:[#allocation2 + $0x30] sm:$0xff]
  %v511 = vld [vmem:[#allocation2 + $0x38] sm:$0xff]
  %v512 = vld [vmem:[#allocation2 + $0x40] sm:$0xff]
  %v513 = vld [vmem:[#allocation2 + $0x48] sm:$0xff]
  %v514 = vld [vmem:[#allocation2 + $0x50] sm:$0xff]
  %v515 = vld [vmem:[#allocation2 + $0x58] sm:$0xff]
  %v516 = vld [vmem:[#allocation2 + $0x60] sm:$0xff]
  %v517 = vld [vmem:[#allocation2 + $0x68] sm:$0xff]
  %v518 = vld [vmem:[#allocation2 + $0x70] sm:$0xff]
  %v519 = vld [vmem:[#allocation2 + $0x78] sm:$0xff]
  %v520 = vmax.f32 %v504, %v472
  %v521 = vmax.f32 %v505, %v473
  %v522 = vmax.f32 %v506, %v474
  %v523 = vmax.f32 %v507, %v475
  %v524 = vmax.f32 %v508, %v476
  %v525 = vmax.f32 %v509, %v477
  %v526 = vmax.f32 %v510, %v478
  %v527 = vmax.f32 %v511, %v479
  %v528 = vmax.f32 %v512, %v480
  %v529 = vmax.f32 %v513, %v481
  %v530 = vmax.f32 %v514, %v482
  %v531 = vmax.f32 %v515, %v483
  %v532 = vmax.f32 %v516, %v484
  %v533 = vmax.f32 %v517, %v485
  %v534 = vmax.f32 %v518, %v486
  %v535 = vmax.f32 %v519, %v487
  %536 = vst [vmem:[#allocation2] sm:$0xff] %v520
  %537 = vst [vmem:[#allocation2 + $0x8] sm:$0xff] %v521
  %538 = vst [vmem:[#allocation2 + $0x10] sm:$0xff] %v522
  %539 = vst [vmem:[#allocation2 + $0x18] sm:$0xff] %v523
  %540 = vst [vmem:[#allocation2 + $0x20] sm:$0xff] %v524
  %541 = vst [vmem:[#allocation2 + $0x28] sm:$0xff] %v525
  %542 = vst [vmem:[#allocation2 + $0x30] sm:$0xff] %v526
  %543 = vst [vmem:[#allocation2 + $0x38] sm:$0xff] %v527
  %544 = vst [vmem:[#allocation2 + $0x40] sm:$0xff] %v528
  %545 = vst [vmem:[#allocation2 + $0x48] sm:$0xff] %v529
  %546 = vst [vmem:[#allocation2 + $0x50] sm:$0xff] %v530
  %547 = vst [vmem:[#allocation2 + $0x58] sm:$0xff] %v531
  %548 = vst [vmem:[#allocation2 + $0x60] sm:$0xff] %v532
  %549 = vst [vmem:[#allocation2 + $0x68] sm:$0xff] %v533
  %550 = vst [vmem:[#allocation2 + $0x70] sm:$0xff] %v534
  %551 = vst [vmem:[#allocation2 + $0x78] sm:$0xff] %v535
  %v552 = vld [vmem:[#allocation3] sm:$0xff]
  %v553 = vld [vmem:[#allocation3 + $0x8] sm:$0xff]
  %v554 = vld [vmem:[#allocation3 + $0x10] sm:$0xff]
  %v555 = vld [vmem:[#allocation3 + $0x18] sm:$0xff]
  %v556 = vld [vmem:[#allocation3 + $0x20] sm:$0xff]
  %v557 = vld [vmem:[#allocation3 + $0x28] sm:$0xff]
  %v558 = vld [vmem:[#allocation3 + $0x30] sm:$0xff]
  %v559 = vld [vmem:[#allocation3 + $0x38] sm:$0xff]
  %v560 = vld [vmem:[#allocation3 + $0x40] sm:$0xff]
  %v561 = vld [vmem:[#allocation3 + $0x48] sm:$0xff]
  %v562 = vld [vmem:[#allocation3 + $0x50] sm:$0xff]
  %v563 = vld [vmem:[#allocation3 + $0x58] sm:$0xff]
  %v564 = vld [vmem:[#allocation3 + $0x60] sm:$0xff]
  %v565 = vld [vmem:[#allocation3 + $0x68] sm:$0xff]
  %v566 = vld [vmem:[#allocation3 + $0x70] sm:$0xff]
  %v567 = vld [vmem:[#allocation3 + $0x78] sm:$0xff]
  %v568 = vmin.f32 %v552, %v488
  %v569 = vmin.f32 %v553, %v489
  %v570 = vmin.f32 %v554, %v490
  %v571 = vmin.f32 %v555, %v491
  %v572 = vmin.f32 %v556, %v492
  %v573 = vmin.f32 %v557, %v493
  %v574 = vmin.f32 %v558, %v494
  %v575 = vmin.f32 %v559, %v495
  %v576 = vmin.f32 %v560, %v496
  %v577 = vmin.f32 %v561, %v497
  %v578 = vmin.f32 %v562, %v498
  %v579 = vmin.f32 %v563, %v499
  %v580 = vmin.f32 %v564, %v500
  %v581 = vmin.f32 %v565, %v501
  %v582 = vmin.f32 %v566, %v502
  %v583 = vmin.f32 %v567, %v503
  %584 = vst [vmem:[#allocation3] sm:$0xff] %v568
  %585 = vst [vmem:[#allocation3 + $0x8] sm:$0xff] %v569
  %586 = vst [vmem:[#allocation3 + $0x10] sm:$0xff] %v570
  %587 = vst [vmem:[#allocation3 + $0x18] sm:$0xff] %v571
  %588 = vst [vmem:[#allocation3 + $0x20] sm:$0xff] %v572
  %589 = vst [vmem:[#allocation3 + $0x28] sm:$0xff] %v573
  %590 = vst [vmem:[#allocation3 + $0x30] sm:$0xff] %v574
  %591 = vst [vmem:[#allocation3 + $0x38] sm:$0xff] %v575
  %592 = vst [vmem:[#allocation3 + $0x40] sm:$0xff] %v576
  %593 = vst [vmem:[#allocation3 + $0x48] sm:$0xff] %v577
  %594 = vst [vmem:[#allocation3 + $0x50] sm:$0xff] %v578
  %595 = vst [vmem:[#allocation3 + $0x58] sm:$0xff] %v579
  %596 = vst [vmem:[#allocation3 + $0x60] sm:$0xff] %v580
  %597 = vst [vmem:[#allocation3 + $0x68] sm:$0xff] %v581
  %598 = vst [vmem:[#allocation3 + $0x70] sm:$0xff] %v582
  %599 = vst [vmem:[#allocation3 + $0x78] sm:$0xff] %v583
  // Predicated region
  $region30: #{tpu_custom_call.1} parent=0 // pred_check
    %p600 = pneg %p23
  $region31: #{tpu_custom_call.1} parent=0 // pred_check_branch
    %602 = sbr.rel (%p600) target = $region33
  $region32: #{tpu_custom_call.1} parent=0 // pred_region
    %v603 = vld [vmem:[#allocation2] sm:$0xff]
    %v604 = vld [vmem:[#allocation2 + $0x8] sm:$0xff]
    %v605 = vld [vmem:[#allocation2 + $0x10] sm:$0xff]
    %v606 = vld [vmem:[#allocation2 + $0x18] sm:$0xff]
    %v607 = vld [vmem:[#allocation2 + $0x20] sm:$0xff]
    %v608 = vld [vmem:[#allocation2 + $0x28] sm:$0xff]
    %v609 = vld [vmem:[#allocation2 + $0x30] sm:$0xff]
    %v610 = vld [vmem:[#allocation2 + $0x38] sm:$0xff]
    %v611 = vld [vmem:[#allocation2 + $0x40] sm:$0xff]
    %v612 = vld [vmem:[#allocation2 + $0x48] sm:$0xff]
    %v613 = vld [vmem:[#allocation2 + $0x50] sm:$0xff]
    %v614 = vld [vmem:[#allocation2 + $0x58] sm:$0xff]
    %v615 = vld [vmem:[#allocation2 + $0x60] sm:$0xff]
    %v616 = vld [vmem:[#allocation2 + $0x68] sm:$0xff]
    %v617 = vld [vmem:[#allocation2 + $0x70] sm:$0xff]
    %v618 = vld [vmem:[#allocation2 + $0x78] sm:$0xff]
    %619 = vmax.xlane.f32.xlu0 %v603
    %v620 = vpop.xlane.xlu0 %619
    %621 = vmax.xlane.f32.xlu0 %v604
    %v622 = vpop.xlane.xlu0 %621
    %623 = vmax.xlane.f32.xlu0 %v605
    %v624 = vpop.xlane.xlu0 %623
    %625 = vmax.xlane.f32.xlu0 %v606
    %v626 = vpop.xlane.xlu0 %625
    %627 = vmax.xlane.f32.xlu0 %v607
    %v628 = vpop.xlane.xlu0 %627
    %629 = vmax.xlane.f32.xlu0 %v608
    %v630 = vpop.xlane.xlu0 %629
    %631 = vmax.xlane.f32.xlu0 %v609
    %v632 = vpop.xlane.xlu0 %631
    %633 = vmax.xlane.f32.xlu0 %v610
    %v634 = vpop.xlane.xlu0 %633
    %635 = vmax.xlane.f32.xlu0 %v611
    %v636 = vpop.xlane.xlu0 %635
    %637 = vmax.xlane.f32.xlu0 %v612
    %v638 = vpop.xlane.xlu0 %637
    %639 = vmax.xlane.f32.xlu0 %v613
    %v640 = vpop.xlane.xlu0 %639
    %641 = vmax.xlane.f32.xlu0 %v614
    %v642 = vpop.xlane.xlu0 %641
    %643 = vmax.xlane.f32.xlu0 %v615
    %v644 = vpop.xlane.xlu0 %643
    %645 = vmax.xlane.f32.xlu0 %v616
    %v646 = vpop.xlane.xlu0 %645
    %647 = vmax.xlane.f32.xlu0 %v617
    %v648 = vpop.xlane.xlu0 %647
    %649 = vmax.xlane.f32.xlu0 %v618
    %v650 = vpop.xlane.xlu0 %649
    %v651 = vld [vmem:[#allocation3] sm:$0xff]
    %v652 = vld [vmem:[#allocation3 + $0x8] sm:$0xff]
    %v653 = vld [vmem:[#allocation3 + $0x10] sm:$0xff]
    %v654 = vld [vmem:[#allocation3 + $0x18] sm:$0xff]
    %v655 = vld [vmem:[#allocation3 + $0x20] sm:$0xff]
    %v656 = vld [vmem:[#allocation3 + $0x28] sm:$0xff]
    %v657 = vld [vmem:[#allocation3 + $0x30] sm:$0xff]
    %v658 = vld [vmem:[#allocation3 + $0x38] sm:$0xff]
    %v659 = vld [vmem:[#allocation3 + $0x40] sm:$0xff]
    %v660 = vld [vmem:[#allocation3 + $0x48] sm:$0xff]
    %v661 = vld [vmem:[#allocation3 + $0x50] sm:$0xff]
    %v662 = vld [vmem:[#allocation3 + $0x58] sm:$0xff]
    %v663 = vld [vmem:[#allocation3 + $0x60] sm:$0xff]
    %v664 = vld [vmem:[#allocation3 + $0x68] sm:$0xff]
    %v665 = vld [vmem:[#allocation3 + $0x70] sm:$0xff]
    %v666 = vld [vmem:[#allocation3 + $0x78] sm:$0xff]
    %667 = vmin.xlane.f32.xlu0 %v651
    %v668 = vpop.xlane.xlu0 %667
    %669 = vmin.xlane.f32.xlu0 %v652
    %v670 = vpop.xlane.xlu0 %669
    %671 = vmin.xlane.f32.xlu0 %v653
    %v672 = vpop.xlane.xlu0 %671
    %673 = vmin.xlane.f32.xlu0 %v654
    %v674 = vpop.xlane.xlu0 %673
    %675 = vmin.xlane.f32.xlu0 %v655
    %v676 = vpop.xlane.xlu0 %675
    %677 = vmin.xlane.f32.xlu0 %v656
    %v678 = vpop.xlane.xlu0 %677
    %679 = vmin.xlane.f32.xlu0 %v657
    %v680 = vpop.xlane.xlu0 %679
    %681 = vmin.xlane.f32.xlu0 %v658
    %v682 = vpop.xlane.xlu0 %681
    %683 = vmin.xlane.f32.xlu0 %v659
    %v684 = vpop.xlane.xlu0 %683
    %685 = vmin.xlane.f32.xlu0 %v660
    %v686 = vpop.xlane.xlu0 %685
    %687 = vmin.xlane.f32.xlu0 %v661
    %v688 = vpop.xlane.xlu0 %687
    %689 = vmin.xlane.f32.xlu0 %v662
    %v690 = vpop.xlane.xlu0 %689
    %691 = vmin.xlane.f32.xlu0 %v663
    %v692 = vpop.xlane.xlu0 %691
    %693 = vmin.xlane.f32.xlu0 %v664
    %v694 = vpop.xlane.xlu0 %693
    %695 = vmin.xlane.f32.xlu0 %v665
    %v696 = vpop.xlane.xlu0 %695
    %697 = vmin.xlane.f32.xlu0 %v666
    %v698 = vpop.xlane.xlu0 %697
    %v699 = vmax.f32 %v620, 1e-12
    %v700 = vmax.f32 %v622, 1e-12
    %v701 = vmax.f32 %v624, 1e-12
    %v702 = vmax.f32 %v626, 1e-12
    %v703 = vmax.f32 %v628, 1e-12
    %v704 = vmax.f32 %v630, 1e-12
    %v705 = vmax.f32 %v632, 1e-12
    %v706 = vmax.f32 %v634, 1e-12
    %v707 = vmax.f32 %v636, 1e-12
    %v708 = vmax.f32 %v638, 1e-12
    %v709 = vmax.f32 %v640, 1e-12
    %v710 = vmax.f32 %v642, 1e-12
    %v711 = vmax.f32 %v644, 1e-12
    %v712 = vmax.f32 %v646, 1e-12
    %v713 = vmax.f32 %v648, 1e-12
    %v714 = vmax.f32 %v650, 1e-12
    %v715 = vrsqrt.pop %v699
    %v716 = vmul.f32 %v699, %v715
    %vm717 = vcmp.eq.f32.partialorder %v699, inf
    %v718 = vsel %vm717, %v699, %v716
    %vm719 = vcmp.eq.f32.partialorder %v699, 0.0
    %v720 = vand.u32 %v699, 2147483648
    %v721 = vsel %vm719, %v720, %v718
    %v722 = vrsqrt.pop %v700
    %v723 = vmul.f32 %v700, %v722
    %vm724 = vcmp.eq.f32.partialorder %v700, inf
    %v725 = vsel %vm724, %v700, %v723
    %vm726 = vcmp.eq.f32.partialorder %v700, 0.0
    %v727 = vand.u32 %v700, 2147483648
    %v728 = vsel %vm726, %v727, %v725
    %v729 = vrsqrt.pop %v701
    %v730 = vmul.f32 %v701, %v729
    %vm731 = vcmp.eq.f32.partialorder %v701, inf
    %v732 = vsel %vm731, %v701, %v730
    %vm733 = vcmp.eq.f32.partialorder %v701, 0.0
    %v734 = vand.u32 %v701, 2147483648
    %v735 = vsel %vm733, %v734, %v732
    %v736 = vrsqrt.pop %v702
    %v737 = vmul.f32 %v702, %v736
    %vm738 = vcmp.eq.f32.partialorder %v702, inf
    %v739 = vsel %vm738, %v702, %v737
    %vm740 = vcmp.eq.f32.partialorder %v702, 0.0
    %v741 = vand.u32 %v702, 2147483648
    %v742 = vsel %vm740, %v741, %v739
    %v743 = vrsqrt.pop %v703
    %v744 = vmul.f32 %v703, %v743
    %vm745 = vcmp.eq.f32.partialorder %v703, inf
    %v746 = vsel %vm745, %v703, %v744
    %vm747 = vcmp.eq.f32.partialorder %v703, 0.0
    %v748 = vand.u32 %v703, 2147483648
    %v749 = vsel %vm747, %v748, %v746
    %v750 = vrsqrt.pop %v704
    %v751 = vmul.f32 %v704, %v750
    %vm752 = vcmp.eq.f32.partialorder %v704, inf
    %v753 = vsel %vm752, %v704, %v751
    %vm754 = vcmp.eq.f32.partialorder %v704, 0.0
    %v755 = vand.u32 %v704, 2147483648
    %v756 = vsel %vm754, %v755, %v753
    %v757 = vrsqrt.pop %v705
    %v758 = vmul.f32 %v705, %v757
    %vm759 = vcmp.eq.f32.partialorder %v705, inf
    %v760 = vsel %vm759, %v705, %v758
    %vm761 = vcmp.eq.f32.partialorder %v705, 0.0
    %v762 = vand.u32 %v705, 2147483648
    %v763 = vsel %vm761, %v762, %v760
    %v764 = vrsqrt.pop %v706
    %v765 = vmul.f32 %v706, %v764
    %vm766 = vcmp.eq.f32.partialorder %v706, inf
    %v767 = vsel %vm766, %v706, %v765
    %vm768 = vcmp.eq.f32.partialorder %v706, 0.0
    %v769 = vand.u32 %v706, 2147483648
    %v770 = vsel %vm768, %v769, %v767
    %v771 = vrsqrt.pop %v707
    %v772 = vmul.f32 %v707, %v771
    %vm773 = vcmp.eq.f32.partialorder %v707, inf
    %v774 = vsel %vm773, %v707, %v772
    %vm775 = vcmp.eq.f32.partialorder %v707, 0.0
    %v776 = vand.u32 %v707, 2147483648
    %v777 = vsel %vm775, %v776, %v774
    %v778 = vrsqrt.pop %v708
    %v779 = vmul.f32 %v708, %v778
    %vm780 = vcmp.eq.f32.partialorder %v708, inf
    %v781 = vsel %vm780, %v708, %v779
    %vm782 = vcmp.eq.f32.partialorder %v708, 0.0
    %v783 = vand.u32 %v708, 2147483648
    %v784 = vsel %vm782, %v783, %v781
    %v785 = vrsqrt.pop %v709
    %v786 = vmul.f32 %v709, %v785
    %vm787 = vcmp.eq.f32.partialorder %v709, inf
    %v788 = vsel %vm787, %v709, %v786
    %vm789 = vcmp.eq.f32.partialorder %v709, 0.0
    %v790 = vand.u32 %v709, 2147483648
    %v791 = vsel %vm789, %v790, %v788
    %v792 = vrsqrt.pop %v710
    %v793 = vmul.f32 %v710, %v792
    %vm794 = vcmp.eq.f32.partialorder %v710, inf
    %v795 = vsel %vm794, %v710, %v793
    %vm796 = vcmp.eq.f32.partialorder %v710, 0.0
    %v797 = vand.u32 %v710, 2147483648
    %v798 = vsel %vm796, %v797, %v795
    %v799 = vrsqrt.pop %v711
    %v800 = vmul.f32 %v711, %v799
    %vm801 = vcmp.eq.f32.partialorder %v711, inf
    %v802 = vsel %vm801, %v711, %v800
    %vm803 = vcmp.eq.f32.partialorder %v711, 0.0
    %v804 = vand.u32 %v711, 2147483648
    %v805 = vsel %vm803, %v804, %v802
    %v806 = vrsqrt.pop %v712
    %v807 = vmul.f32 %v712, %v806
    %vm808 = vcmp.eq.f32.partialorder %v712, inf
    %v809 = vsel %vm808, %v712, %v807
    %vm810 = vcmp.eq.f32.partialorder %v712, 0.0
    %v811 = vand.u32 %v712, 2147483648
    %v812 = vsel %vm810, %v811, %v809
    %v813 = vrsqrt.pop %v713
    %v814 = vmul.f32 %v713, %v813
    %vm815 = vcmp.eq.f32.partialorder %v713, inf
    %v816 = vsel %vm815, %v713, %v814
    %vm817 = vcmp.eq.f32.partialorder %v713, 0.0
    %v818 = vand.u32 %v713, 2147483648
    %v819 = vsel %vm817, %v818, %v816
    %v820 = vrsqrt.pop %v714
    %v821 = vmul.f32 %v714, %v820
    %vm822 = vcmp.eq.f32.partialorder %v714, inf
    %v823 = vsel %vm822, %v714, %v821
    %vm824 = vcmp.eq.f32.partialorder %v714, 0.0
    %v825 = vand.u32 %v714, 2147483648
    %v826 = vsel %vm824, %v825, %v823
    %v827 = vmax.f32 %v668, 1e-12
    %v828 = vmax.f32 %v670, 1e-12
    %v829 = vmax.f32 %v672, 1e-12
    %v830 = vmax.f32 %v674, 1e-12
    %v831 = vmax.f32 %v676, 1e-12
    %v832 = vmax.f32 %v678, 1e-12
    %v833 = vmax.f32 %v680, 1e-12
    %v834 = vmax.f32 %v682, 1e-12
    %v835 = vmax.f32 %v684, 1e-12
    %v836 = vmax.f32 %v686, 1e-12
    %v837 = vmax.f32 %v688, 1e-12
    %v838 = vmax.f32 %v690, 1e-12
    %v839 = vmax.f32 %v692, 1e-12
    %v840 = vmax.f32 %v694, 1e-12
    %v841 = vmax.f32 %v696, 1e-12
    %v842 = vmax.f32 %v698, 1e-12
    %v843 = vrsqrt.pop %v827
    %v844 = vmul.f32 %v827, %v843
    %vm845 = vcmp.eq.f32.partialorder %v827, inf
    %v846 = vsel %vm845, %v827, %v844
    %vm847 = vcmp.eq.f32.partialorder %v827, 0.0
    %v848 = vand.u32 %v827, 2147483648
    %v849 = vsel %vm847, %v848, %v846
    %v850 = vrsqrt.pop %v828
    %v851 = vmul.f32 %v828, %v850
    %vm852 = vcmp.eq.f32.partialorder %v828, inf
    %v853 = vsel %vm852, %v828, %v851
    %vm854 = vcmp.eq.f32.partialorder %v828, 0.0
    %v855 = vand.u32 %v828, 2147483648
    %v856 = vsel %vm854, %v855, %v853
    %v857 = vrsqrt.pop %v829
    %v858 = vmul.f32 %v829, %v857
    %vm859 = vcmp.eq.f32.partialorder %v829, inf
    %v860 = vsel %vm859, %v829, %v858
    %vm861 = vcmp.eq.f32.partialorder %v829, 0.0
    %v862 = vand.u32 %v829, 2147483648
    %v863 = vsel %vm861, %v862, %v860
    %v864 = vrsqrt.pop %v830
    %v865 = vmul.f32 %v830, %v864
    %vm866 = vcmp.eq.f32.partialorder %v830, inf
    %v867 = vsel %vm866, %v830, %v865
    %vm868 = vcmp.eq.f32.partialorder %v830, 0.0
    %v869 = vand.u32 %v830, 2147483648
    %v870 = vsel %vm868, %v869, %v867
    %v871 = vrsqrt.pop %v831
    %v872 = vmul.f32 %v831, %v871
    %vm873 = vcmp.eq.f32.partialorder %v831, inf
    %v874 = vsel %vm873, %v831, %v872
    %vm875 = vcmp.eq.f32.partialorder %v831, 0.0
    %v876 = vand.u32 %v831, 2147483648
    %v877 = vsel %vm875, %v876, %v874
    %v878 = vrsqrt.pop %v832
    %v879 = vmul.f32 %v832, %v878
    %vm880 = vcmp.eq.f32.partialorder %v832, inf
    %v881 = vsel %vm880, %v832, %v879
    %vm882 = vcmp.eq.f32.partialorder %v832, 0.0
    %v883 = vand.u32 %v832, 2147483648
    %v884 = vsel %vm882, %v883, %v881
    %v885 = vrsqrt.pop %v833
    %v886 = vmul.f32 %v833, %v885
    %vm887 = vcmp.eq.f32.partialorder %v833, inf
    %v888 = vsel %vm887, %v833, %v886
    %vm889 = vcmp.eq.f32.partialorder %v833, 0.0
    %v890 = vand.u32 %v833, 2147483648
    %v891 = vsel %vm889, %v890, %v888
    %v892 = vrsqrt.pop %v834
    %v893 = vmul.f32 %v834, %v892
    %vm894 = vcmp.eq.f32.partialorder %v834, inf
    %v895 = vsel %vm894, %v834, %v893
    %vm896 = vcmp.eq.f32.partialorder %v834, 0.0
    %v897 = vand.u32 %v834, 2147483648
    %v898 = vsel %vm896, %v897, %v895
    %v899 = vrsqrt.pop %v835
    %v900 = vmul.f32 %v835, %v899
    %vm901 = vcmp.eq.f32.partialorder %v835, inf
    %v902 = vsel %vm901, %v835, %v900
    %vm903 = vcmp.eq.f32.partialorder %v835, 0.0
    %v904 = vand.u32 %v835, 2147483648
    %v905 = vsel %vm903, %v904, %v902
    %v906 = vrsqrt.pop %v836
    %v907 = vmul.f32 %v836, %v906
    %vm908 = vcmp.eq.f32.partialorder %v836, inf
    %v909 = vsel %vm908, %v836, %v907
    %vm910 = vcmp.eq.f32.partialorder %v836, 0.0
    %v911 = vand.u32 %v836, 2147483648
    %v912 = vsel %vm910, %v911, %v909
    %v913 = vrsqrt.pop %v837
    %v914 = vmul.f32 %v837, %v913
    %vm915 = vcmp.eq.f32.partialorder %v837, inf
    %v916 = vsel %vm915, %v837, %v914
    %vm917 = vcmp.eq.f32.partialorder %v837, 0.0
    %v918 = vand.u32 %v837, 2147483648
    %v919 = vsel %vm917, %v918, %v916
    %v920 = vrsqrt.pop %v838
    %v921 = vmul.f32 %v838, %v920
    %vm922 = vcmp.eq.f32.partialorder %v838, inf
    %v923 = vsel %vm922, %v838, %v921
    %vm924 = vcmp.eq.f32.partialorder %v838, 0.0
    %v925 = vand.u32 %v838, 2147483648
    %v926 = vsel %vm924, %v925, %v923
    %v927 = vrsqrt.pop %v839
    %v928 = vmul.f32 %v839, %v927
    %vm929 = vcmp.eq.f32.partialorder %v839, inf
    %v930 = vsel %vm929, %v839, %v928
    %vm931 = vcmp.eq.f32.partialorder %v839, 0.0
    %v932 = vand.u32 %v839, 2147483648
    %v933 = vsel %vm931, %v932, %v930
    %v934 = vrsqrt.pop %v840
    %v935 = vmul.f32 %v840, %v934
    %vm936 = vcmp.eq.f32.partialorder %v840, inf
    %v937 = vsel %vm936, %v840, %v935
    %vm938 = vcmp.eq.f32.partialorder %v840, 0.0
    %v939 = vand.u32 %v840, 2147483648
    %v940 = vsel %vm938, %v939, %v937
    %v941 = vrsqrt.pop %v841
    %v942 = vmul.f32 %v841, %v941
    %vm943 = vcmp.eq.f32.partialorder %v841, inf
    %v944 = vsel %vm943, %v841, %v942
    %vm945 = vcmp.eq.f32.partialorder %v841, 0.0
    %v946 = vand.u32 %v841, 2147483648
    %v947 = vsel %vm945, %v946, %v944
    %v948 = vrsqrt.pop %v842
    %v949 = vmul.f32 %v842, %v948
    %vm950 = vcmp.eq.f32.partialorder %v842, inf
    %v951 = vsel %vm950, %v842, %v949
    %vm952 = vcmp.eq.f32.partialorder %v842, 0.0
    %v953 = vand.u32 %v842, 2147483648
    %v954 = vsel %vm952, %v953, %v951
    %v955 = vsub.f32 %v721, %v849
    %v956 = vsub.f32 %v728, %v856
    %v957 = vsub.f32 %v735, %v863
    %v958 = vsub.f32 %v742, %v870
    %v959 = vsub.f32 %v749, %v877
    %v960 = vsub.f32 %v756, %v884
    %v961 = vsub.f32 %v763, %v891
    %v962 = vsub.f32 %v770, %v898
    %v963 = vsub.f32 %v777, %v905
    %v964 = vsub.f32 %v784, %v912
    %v965 = vsub.f32 %v791, %v919
    %v966 = vsub.f32 %v798, %v926
    %v967 = vsub.f32 %v805, %v933
    %v968 = vsub.f32 %v812, %v940
    %v969 = vsub.f32 %v819, %v947
    %v970 = vsub.f32 %v826, %v954
    %v971 = vadd.f32 %v955, 0.3
    %v972 = vadd.f32 %v956, 0.3
    %v973 = vadd.f32 %v957, 0.3
    %v974 = vadd.f32 %v958, 0.3
    %v975 = vadd.f32 %v959, 0.3
    %v976 = vadd.f32 %v960, 0.3
    %v977 = vadd.f32 %v961, 0.3
    %v978 = vadd.f32 %v962, 0.3
    %v979 = vadd.f32 %v963, 0.3
    %v980 = vadd.f32 %v964, 0.3
    %v981 = vadd.f32 %v965, 0.3
    %v982 = vadd.f32 %v966, 0.3
    %v983 = vadd.f32 %v967, 0.3
    %v984 = vadd.f32 %v968, 0.3
    %v985 = vadd.f32 %v969, 0.3
    %v986 = vadd.f32 %v970, 0.3
    %v987 = vmax.f32 %v971, 0.0
    %v988 = vmax.f32 %v972, 0.0
    %v989 = vmax.f32 %v973, 0.0
    %v990 = vmax.f32 %v974, 0.0
    %v991 = vmax.f32 %v975, 0.0
    %v992 = vmax.f32 %v976, 0.0
    %v993 = vmax.f32 %v977, 0.0
    %v994 = vmax.f32 %v978, 0.0
    %v995 = vmax.f32 %v979, 0.0
    %v996 = vmax.f32 %v980, 0.0
    %v997 = vmax.f32 %v981, 0.0
    %v998 = vmax.f32 %v982, 0.0
    %v999 = vmax.f32 %v983, 0.0
    %v1000 = vmax.f32 %v984, 0.0
    %v1001 = vmax.f32 %v985, 0.0
    %v1002 = vmax.f32 %v986, 0.0
    %vm1003 = vcmask 7168
    %1004 = vst.msk [vmem:[%s6] sm:$0xff] %vm1003, %v987
    %1005 = vst.msk [vmem:[%s6 + $0x8] sm:$0xff] %vm1003, %v988
    %1006 = vst.msk [vmem:[%s6 + $0x10] sm:$0xff] %vm1003, %v989
    %1007 = vst.msk [vmem:[%s6 + $0x18] sm:$0xff] %vm1003, %v990
    %1008 = vst.msk [vmem:[%s6 + $0x20] sm:$0xff] %vm1003, %v991
    %1009 = vst.msk [vmem:[%s6 + $0x28] sm:$0xff] %vm1003, %v992
    %1010 = vst.msk [vmem:[%s6 + $0x30] sm:$0xff] %vm1003, %v993
    %1011 = vst.msk [vmem:[%s6 + $0x38] sm:$0xff] %vm1003, %v994
    %1012 = vst.msk [vmem:[%s6 + $0x40] sm:$0xff] %vm1003, %v995
    %1013 = vst.msk [vmem:[%s6 + $0x48] sm:$0xff] %vm1003, %v996
    %1014 = vst.msk [vmem:[%s6 + $0x50] sm:$0xff] %vm1003, %v997
    %1015 = vst.msk [vmem:[%s6 + $0x58] sm:$0xff] %vm1003, %v998
    %1016 = vst.msk [vmem:[%s6 + $0x60] sm:$0xff] %vm1003, %v999
    %1017 = vst.msk [vmem:[%s6 + $0x68] sm:$0xff] %vm1003, %v1000
    %1018 = vst.msk [vmem:[%s6 + $0x70] sm:$0xff] %vm1003, %v1001
    %1019 = vst.msk [vmem:[%s6 + $0x78] sm:$0xff] %vm1003, %v1002
  $region33: #{tpu_custom_call.1} parent=0 // pred_fallthru
    _
  // Predicated region
  $region34: #{tpu_custom_call.1} parent=0 // pred_check
    _
  $region35: #{tpu_custom_call.1} parent=0 // pred_check_branch
    %1021 = sbr.rel (0) target = $region37
  $region36: #{tpu_custom_call.1} parent=0 // pred_region
    _
  $region37: #{tpu_custom_call.1} parent=0 // pred_fallthru
    _
  // Predicated region
  $region38: #{tpu_custom_call.1} parent=0 // pred_check
    _
  $region39: #{tpu_custom_call.1} parent=0 // pred_check_branch
    %1023 = sbr.rel (0) target = $region41
  $region40: #{tpu_custom_call.1} parent=0 // pred_region
    _
  $region41: #{tpu_custom_call.1} parent=0 // pred_fallthru
    _

</llo_original>
